<compile_context>
chip_gen: v6e
topology: v6e:2x2x1
jax: 0.10.0
libtpu: 0.0.40
codegen_flags: <defaults>
</compile_context>

<pallas_src>
import jax
import jax.numpy as jnp
from jax import lax
from jax.experimental import pallas as pl
from jax.experimental.pallas import tpu as pltpu

HIDDEN = 10
LANES = 128
# Offsets inside the packed parameter vector:
# [w1(10), b1(10), w2(100 row-major), b2(10), w3(10), b3(1)]
W1_OFF, B1_OFF, W2_OFF, B2_OFF, W3_OFF, B3_OFF = 0, 10, 20, 120, 130, 140
P_SIZE = 141


def _mlp_chunk(p_ref, x):
    """Apply the full 1->10->10->1 MLP to one (chunk_rows, 128) slab.

    p_ref: (141,) f32 SMEM ref (packed weights/biases, scalar reads).
    x:     (chunk_rows, 128) f32 array (batch on sublanes x lanes).
    """
    # Layer 1 (in_features = 1): h1[j] = tanh(x * w1[0,j] + b1[j]).
    h1 = [
        jnp.tanh(x * p_ref[W1_OFF + j] + p_ref[B1_OFF + j])
        for j in range(HIDDEN)
    ]

    # Layers 2 + 3 fused: per hidden-2 channel k, accumulate the 10-term dot
    # on the VPU, tanh on the EUP, and fold into the output with w3[k].
    out = None
    for k in range(HIDDEN):
        acc = h1[0] * p_ref[W2_OFF + k] + p_ref[B2_OFF + k]
        for j in range(1, HIDDEN):
            acc = acc + h1[j] * p_ref[W2_OFF + j * HIDDEN + k]
        term = jnp.tanh(acc) * p_ref[W3_OFF + k]
        out = term if out is None else out + term

    return out + p_ref[B3_OFF]


def make_kernel(block_rows, chunk_rows):
    """Build a kernel for a (block_rows, 128) block, chunked by chunk_rows."""
    assert block_rows % chunk_rows == 0
    n_chunks = block_rows // chunk_rows

    def kernel(p_ref, x_ref, o_ref):
        if n_chunks == 1:
            # Tiny block: process in one shot.
            o_ref[...] = _mlp_chunk(p_ref, x_ref[...])
        else:
            # fori_loop (not a Python for) so live ranges are bounded per
            # chunk and nothing spills to VMEM.
            def body(c, carry):
                r0 = pl.multiple_of(c * chunk_rows, chunk_rows)
                xs = x_ref[pl.ds(r0, chunk_rows), :]
                o_ref[pl.ds(r0, chunk_rows), :] = _mlp_chunk(p_ref, xs)
                return carry

            lax.fori_loop(0, n_chunks, body, 0)

    return kernel


def pack_params(params):
    w1, b1, w2, b2, w3, b3 = params
    packed = jnp.concatenate([
        w1.reshape(-1),  # w1[0, j]         -> [0, 10)
        b1.reshape(-1),  # b1[j]            -> [10, 20)
        w2.reshape(-1),  # w2[j, k] row-maj -> [20, 120)
        b2.reshape(-1),  # b2[k]            -> [120, 130)
        w3.reshape(-1),  # w3[k, 0]         -> [130, 140)
        b3.reshape(-1),  # b3               -> [140]
    ]).astype(jnp.float32)
    assert packed.shape == (P_SIZE,)
    return packed


def mlp_forward(x, params, *, block_rows=1024, chunk_rows=32, min_blocks=2):
    """Run the 3-layer MLP on x of shape (N, 1), returning (N, 1) float32.

    The batch is laid out lane-dense as (rows, 128).  Each grid step handles
    one (br, 128) block, internally looped over chunk_rows-row slabs.  The
    grid uses ceil-division (uneven last block handled by Pallas); padding /
    slicing only happens when N is not a multiple of 128.
    """
    assert x.ndim == 2 and x.shape[1] == 1, x.shape
    assert chunk_rows % 8 == 0, "chunk_rows must be a multiple of 8 (sublanes)"
    assert block_rows % chunk_rows == 0

    N = x.shape[0]
    packed = pack_params(params)
    rows = pl.cdiv(N, LANES)

    if rows <= chunk_rows:
        # Tiny batch: one block equal to the full array dims (always legal).
        br, ch = rows, rows
    else:
        # >= min_blocks grid steps (keeps both v7x TensorCores busy), each a
        # multiple of chunk_rows so the in-kernel loop divides evenly, capped
        # at block_rows.
        per_block = pl.cdiv(rows, min_blocks)
        per_block = pl.cdiv(per_block, chunk_rows) * chunk_rows
        br = max(chunk_rows, min(block_rows, per_block))
        ch = chunk_rows
    n_blocks = pl.cdiv(rows, br)

    total = rows * LANES
    x_flat = x.reshape(-1).astype(jnp.float32)
    if total != N:  # only ragged N pays a pad pass; aligned N is a free reshape
        x_flat = jnp.pad(x_flat, (0, total - N))
    x2d = x_flat.reshape(rows, LANES)

    out2d = pl.pallas_call(
        make_kernel(br, ch),
        out_shape=jax.ShapeDtypeStruct((rows, LANES), jnp.float32),
        grid_spec=pl.GridSpec(
            grid=(n_blocks,),
            in_specs=[
                # Packed params: whole array resident in SMEM (scalar reads).
                pl.BlockSpec(memory_space=pltpu.MemorySpace.SMEM),
                # Lane-dense batch block.
                pl.BlockSpec((br, LANES), lambda i: (i, 0)),
            ],
            out_specs=pl.BlockSpec((br, LANES), lambda i: (i, 0)),
        ),
        compiler_params=pltpu.CompilerParams(
            dimension_semantics=("parallel",),  # shard grid steps across TCs
        ),
    )(packed, x2d)

    out_flat = out2d.reshape(-1)
    if total != N:
        out_flat = out_flat[:N]
    return out_flat.reshape(N, 1)


def init_params(key):
    """PyTorch nn.Linear default init: U(-1/sqrt(fan_in), 1/sqrt(fan_in)).
    Weights stored pre-transposed as (in_features, out_features)."""
    def linear(key, fan_in, fan_out):
        kw, kb = jax.random.split(key)
        bound = 1.0 / jnp.sqrt(jnp.float32(fan_in))
        w = jax.random.uniform(kw, (fan_in, fan_out), jnp.float32, -bound, bound)
        b = jax.random.uniform(kb, (1, fan_out), jnp.float32, -bound, bound)
        return w, b

    k1, k2, k3 = jax.random.split(key, 3)
    w1, b1 = linear(k1, 1, HIDDEN)
    w2, b2 = linear(k2, HIDDEN, HIDDEN)
    w3, b3 = linear(k3, HIDDEN, 1)
    return w1, b1, w2, b2, w3, b3


def mlp_ref(x, params):
    """Pure-JAX reference for correctness checking."""
    w1, b1, w2, b2, w3, b3 = params
    h1 = jnp.tanh(x @ w1 + b1)
    h2 = jnp.tanh(h1 @ w2 + b2)
    return h2 @ w3 + b3


if __name__ == "__main__":
    key = jax.random.PRNGKey(0)
    kp, kx1, kx2, kx3 = jax.random.split(key, 4)
    params = init_params(kp)

    cases = [
        # Single-block ragged batch (PINN-style): pad/slice path, direct kernel.
        (jax.random.normal(kx1, (1000, 1), dtype=jnp.float32), {}),
        # Multi-block grid + in-kernel chunk loop + uneven last block (small
        # shapes forced via block_rows/chunk_rows so the big-batch code paths
        # are exercised cheaply).
        (jax.random.normal(kx2, (2500, 1), dtype=jnp.float32),
         dict(block_rows=64, chunk_rows=8)),
        # Lane-aligned batch: no pad, no slice.
        (jax.random.normal(kx3, (256, 1), dtype=jnp.float32), {}),
    ]

    for x, kw in cases:
        out = jax.block_until_ready(mlp_forward(x, params, **kw))
        ref = mlp_ref(x, params)
        assert out.shape == x.shape, (out.shape, x.shape)
        err = float(jnp.max(jnp.abs(out - ref)))
        assert jnp.allclose(out, ref, atol=1e-5, rtol=1e-5), err

    print("KERNEL_OK")
</pallas_src>

<mosaic_0001>
module attributes {stable_mosaic.version = 11 : i64} {
  func.func @kernel(%arg0: i32, %arg1: memref<141xf32, #tpu.memory_space<smem>>, %arg2: memref<8x128xf32, #tpu.memory_space<vmem>>, %arg3: memref<8x128xf32, #tpu.memory_space<vmem>>) attributes {dimension_semantics = [#tpu.dimension_semantics<parallel>], iteration_bounds = array<i64: 1>, scalar_prefetch = 0 : i64, scratch_operands = 0 : i64, tpu.core_type = #tpu.core_type<tc>, window_params = [{transform_indices = @transform_0, window_bounds = array<i64: 141>}, {transform_indices = @transform_1, window_bounds = array<i64: 8, 128>}, {transform_indices = @transform_2, window_bounds = array<i64: 8, 128>}]} {
    %c0 = arith.constant 0 : index
    %c0_0 = arith.constant 0 : index
    %0 = vector.load %arg2[%c0, %c0_0] : memref<8x128xf32, #tpu.memory_space<vmem>>, vector<8x128xf32>
    %c0_1 = arith.constant 0 : index
    %1 = memref.load %arg1[%c0_1] : memref<141xf32, #tpu.memory_space<smem>>
    %2 = vector.broadcast %1 : f32 to vector<8x128xf32>
    %3 = arith.mulf %0, %2 : vector<8x128xf32>
    %c10 = arith.constant 10 : index
    %4 = memref.load %arg1[%c10] : memref<141xf32, #tpu.memory_space<smem>>
    %5 = vector.broadcast %4 : f32 to vector<8x128xf32>
    %6 = arith.addf %3, %5 : vector<8x128xf32>
    %7 = math.tanh %6 : vector<8x128xf32>
    %c1 = arith.constant 1 : index
    %8 = memref.load %arg1[%c1] : memref<141xf32, #tpu.memory_space<smem>>
    %9 = vector.broadcast %8 : f32 to vector<8x128xf32>
    %10 = arith.mulf %0, %9 : vector<8x128xf32>
    %c11 = arith.constant 11 : index
    %11 = memref.load %arg1[%c11] : memref<141xf32, #tpu.memory_space<smem>>
    %12 = vector.broadcast %11 : f32 to vector<8x128xf32>
    %13 = arith.addf %10, %12 : vector<8x128xf32>
    %14 = math.tanh %13 : vector<8x128xf32>
    %c2 = arith.constant 2 : index
    %15 = memref.load %arg1[%c2] : memref<141xf32, #tpu.memory_space<smem>>
    %16 = vector.broadcast %15 : f32 to vector<8x128xf32>
    %17 = arith.mulf %0, %16 : vector<8x128xf32>
    %c12 = arith.constant 12 : index
    %18 = memref.load %arg1[%c12] : memref<141xf32, #tpu.memory_space<smem>>
    %19 = vector.broadcast %18 : f32 to vector<8x128xf32>
    %20 = arith.addf %17, %19 : vector<8x128xf32>
    %21 = math.tanh %20 : vector<8x128xf32>
    %c3 = arith.constant 3 : index
    %22 = memref.load %arg1[%c3] : memref<141xf32, #tpu.memory_space<smem>>
    %23 = vector.broadcast %22 : f32 to vector<8x128xf32>
    %24 = arith.mulf %0, %23 : vector<8x128xf32>
    %c13 = arith.constant 13 : index
    %25 = memref.load %arg1[%c13] : memref<141xf32, #tpu.memory_space<smem>>
    %26 = vector.broadcast %25 : f32 to vector<8x128xf32>
    %27 = arith.addf %24, %26 : vector<8x128xf32>
    %28 = math.tanh %27 : vector<8x128xf32>
    %c4 = arith.constant 4 : index
    %29 = memref.load %arg1[%c4] : memref<141xf32, #tpu.memory_space<smem>>
    %30 = vector.broadcast %29 : f32 to vector<8x128xf32>
    %31 = arith.mulf %0, %30 : vector<8x128xf32>
    %c14 = arith.constant 14 : index
    %32 = memref.load %arg1[%c14] : memref<141xf32, #tpu.memory_space<smem>>
    %33 = vector.broadcast %32 : f32 to vector<8x128xf32>
    %34 = arith.addf %31, %33 : vector<8x128xf32>
    %35 = math.tanh %34 : vector<8x128xf32>
    %c5 = arith.constant 5 : index
    %36 = memref.load %arg1[%c5] : memref<141xf32, #tpu.memory_space<smem>>
    %37 = vector.broadcast %36 : f32 to vector<8x128xf32>
    %38 = arith.mulf %0, %37 : vector<8x128xf32>
    %c15 = arith.constant 15 : index
    %39 = memref.load %arg1[%c15] : memref<141xf32, #tpu.memory_space<smem>>
    %40 = vector.broadcast %39 : f32 to vector<8x128xf32>
    %41 = arith.addf %38, %40 : vector<8x128xf32>
    %42 = math.tanh %41 : vector<8x128xf32>
    %c6 = arith.constant 6 : index
    %43 = memref.load %arg1[%c6] : memref<141xf32, #tpu.memory_space<smem>>
    %44 = vector.broadcast %43 : f32 to vector<8x128xf32>
    %45 = arith.mulf %0, %44 : vector<8x128xf32>
    %c16 = arith.constant 16 : index
    %46 = memref.load %arg1[%c16] : memref<141xf32, #tpu.memory_space<smem>>
    %47 = vector.broadcast %46 : f32 to vector<8x128xf32>
    %48 = arith.addf %45, %47 : vector<8x128xf32>
    %49 = math.tanh %48 : vector<8x128xf32>
    %c7 = arith.constant 7 : index
    %50 = memref.load %arg1[%c7] : memref<141xf32, #tpu.memory_space<smem>>
    %51 = vector.broadcast %50 : f32 to vector<8x128xf32>
    %52 = arith.mulf %0, %51 : vector<8x128xf32>
    %c17 = arith.constant 17 : index
    %53 = memref.load %arg1[%c17] : memref<141xf32, #tpu.memory_space<smem>>
    %54 = vector.broadcast %53 : f32 to vector<8x128xf32>
    %55 = arith.addf %52, %54 : vector<8x128xf32>
    %56 = math.tanh %55 : vector<8x128xf32>
    %c8 = arith.constant 8 : index
    %57 = memref.load %arg1[%c8] : memref<141xf32, #tpu.memory_space<smem>>
    %58 = vector.broadcast %57 : f32 to vector<8x128xf32>
    %59 = arith.mulf %0, %58 : vector<8x128xf32>
    %c18 = arith.constant 18 : index
    %60 = memref.load %arg1[%c18] : memref<141xf32, #tpu.memory_space<smem>>
    %61 = vector.broadcast %60 : f32 to vector<8x128xf32>
    %62 = arith.addf %59, %61 : vector<8x128xf32>
    %63 = math.tanh %62 : vector<8x128xf32>
    %c9 = arith.constant 9 : index
    %64 = memref.load %arg1[%c9] : memref<141xf32, #tpu.memory_space<smem>>
    %65 = vector.broadcast %64 : f32 to vector<8x128xf32>
    %66 = arith.mulf %0, %65 : vector<8x128xf32>
    %c19 = arith.constant 19 : index
    %67 = memref.load %arg1[%c19] : memref<141xf32, #tpu.memory_space<smem>>
    %68 = vector.broadcast %67 : f32 to vector<8x128xf32>
    %69 = arith.addf %66, %68 : vector<8x128xf32>
    %70 = math.tanh %69 : vector<8x128xf32>
    %c20 = arith.constant 20 : index
    %71 = memref.load %arg1[%c20] : memref<141xf32, #tpu.memory_space<smem>>
    %72 = vector.broadcast %71 : f32 to vector<8x128xf32>
    %73 = arith.mulf %7, %72 : vector<8x128xf32>
    %c120 = arith.constant 120 : index
    %74 = memref.load %arg1[%c120] : memref<141xf32, #tpu.memory_space<smem>>
    %75 = vector.broadcast %74 : f32 to vector<8x128xf32>
    %76 = arith.addf %73, %75 : vector<8x128xf32>
    %c30 = arith.constant 30 : index
    %77 = memref.load %arg1[%c30] : memref<141xf32, #tpu.memory_space<smem>>
    %78 = vector.broadcast %77 : f32 to vector<8x128xf32>
    %79 = arith.mulf %14, %78 : vector<8x128xf32>
    %80 = arith.addf %76, %79 : vector<8x128xf32>
    %c40 = arith.constant 40 : index
    %81 = memref.load %arg1[%c40] : memref<141xf32, #tpu.memory_space<smem>>
    %82 = vector.broadcast %81 : f32 to vector<8x128xf32>
    %83 = arith.mulf %21, %82 : vector<8x128xf32>
    %84 = arith.addf %80, %83 : vector<8x128xf32>
    %c50 = arith.constant 50 : index
    %85 = memref.load %arg1[%c50] : memref<141xf32, #tpu.memory_space<smem>>
    %86 = vector.broadcast %85 : f32 to vector<8x128xf32>
    %87 = arith.mulf %28, %86 : vector<8x128xf32>
    %88 = arith.addf %84, %87 : vector<8x128xf32>
    %c60 = arith.constant 60 : index
    %89 = memref.load %arg1[%c60] : memref<141xf32, #tpu.memory_space<smem>>
    %90 = vector.broadcast %89 : f32 to vector<8x128xf32>
    %91 = arith.mulf %35, %90 : vector<8x128xf32>
    %92 = arith.addf %88, %91 : vector<8x128xf32>
    %c70 = arith.constant 70 : index
    %93 = memref.load %arg1[%c70] : memref<141xf32, #tpu.memory_space<smem>>
    %94 = vector.broadcast %93 : f32 to vector<8x128xf32>
    %95 = arith.mulf %42, %94 : vector<8x128xf32>
    %96 = arith.addf %92, %95 : vector<8x128xf32>
    %c80 = arith.constant 80 : index
    %97 = memref.load %arg1[%c80] : memref<141xf32, #tpu.memory_space<smem>>
    %98 = vector.broadcast %97 : f32 to vector<8x128xf32>
    %99 = arith.mulf %49, %98 : vector<8x128xf32>
    %100 = arith.addf %96, %99 : vector<8x128xf32>
    %c90 = arith.constant 90 : index
    %101 = memref.load %arg1[%c90] : memref<141xf32, #tpu.memory_space<smem>>
    %102 = vector.broadcast %101 : f32 to vector<8x128xf32>
    %103 = arith.mulf %56, %102 : vector<8x128xf32>
    %104 = arith.addf %100, %103 : vector<8x128xf32>
    %c100 = arith.constant 100 : index
    %105 = memref.load %arg1[%c100] : memref<141xf32, #tpu.memory_space<smem>>
    %106 = vector.broadcast %105 : f32 to vector<8x128xf32>
    %107 = arith.mulf %63, %106 : vector<8x128xf32>
    %108 = arith.addf %104, %107 : vector<8x128xf32>
    %c110 = arith.constant 110 : index
    %109 = memref.load %arg1[%c110] : memref<141xf32, #tpu.memory_space<smem>>
    %110 = vector.broadcast %109 : f32 to vector<8x128xf32>
    %111 = arith.mulf %70, %110 : vector<8x128xf32>
    %112 = arith.addf %108, %111 : vector<8x128xf32>
    %113 = math.tanh %112 : vector<8x128xf32>
    %c130 = arith.constant 130 : index
    %114 = memref.load %arg1[%c130] : memref<141xf32, #tpu.memory_space<smem>>
    %115 = vector.broadcast %114 : f32 to vector<8x128xf32>
    %116 = arith.mulf %113, %115 : vector<8x128xf32>
    %c21 = arith.constant 21 : index
    %117 = memref.load %arg1[%c21] : memref<141xf32, #tpu.memory_space<smem>>
    %118 = vector.broadcast %117 : f32 to vector<8x128xf32>
    %119 = arith.mulf %7, %118 : vector<8x128xf32>
    %c121 = arith.constant 121 : index
    %120 = memref.load %arg1[%c121] : memref<141xf32, #tpu.memory_space<smem>>
    %121 = vector.broadcast %120 : f32 to vector<8x128xf32>
    %122 = arith.addf %119, %121 : vector<8x128xf32>
    %c31 = arith.constant 31 : index
    %123 = memref.load %arg1[%c31] : memref<141xf32, #tpu.memory_space<smem>>
    %124 = vector.broadcast %123 : f32 to vector<8x128xf32>
    %125 = arith.mulf %14, %124 : vector<8x128xf32>
    %126 = arith.addf %122, %125 : vector<8x128xf32>
    %c41 = arith.constant 41 : index
    %127 = memref.load %arg1[%c41] : memref<141xf32, #tpu.memory_space<smem>>
    %128 = vector.broadcast %127 : f32 to vector<8x128xf32>
    %129 = arith.mulf %21, %128 : vector<8x128xf32>
    %130 = arith.addf %126, %129 : vector<8x128xf32>
    %c51 = arith.constant 51 : index
    %131 = memref.load %arg1[%c51] : memref<141xf32, #tpu.memory_space<smem>>
    %132 = vector.broadcast %131 : f32 to vector<8x128xf32>
    %133 = arith.mulf %28, %132 : vector<8x128xf32>
    %134 = arith.addf %130, %133 : vector<8x128xf32>
    %c61 = arith.constant 61 : index
    %135 = memref.load %arg1[%c61] : memref<141xf32, #tpu.memory_space<smem>>
    %136 = vector.broadcast %135 : f32 to vector<8x128xf32>
    %137 = arith.mulf %35, %136 : vector<8x128xf32>
    %138 = arith.addf %134, %137 : vector<8x128xf32>
    %c71 = arith.constant 71 : index
    %139 = memref.load %arg1[%c71] : memref<141xf32, #tpu.memory_space<smem>>
    %140 = vector.broadcast %139 : f32 to vector<8x128xf32>
    %141 = arith.mulf %42, %140 : vector<8x128xf32>
    %142 = arith.addf %138, %141 : vector<8x128xf32>
    %c81 = arith.constant 81 : index
    %143 = memref.load %arg1[%c81] : memref<141xf32, #tpu.memory_space<smem>>
    %144 = vector.broadcast %143 : f32 to vector<8x128xf32>
    %145 = arith.mulf %49, %144 : vector<8x128xf32>
    %146 = arith.addf %142, %145 : vector<8x128xf32>
    %c91 = arith.constant 91 : index
    %147 = memref.load %arg1[%c91] : memref<141xf32, #tpu.memory_space<smem>>
    %148 = vector.broadcast %147 : f32 to vector<8x128xf32>
    %149 = arith.mulf %56, %148 : vector<8x128xf32>
    %150 = arith.addf %146, %149 : vector<8x128xf32>
    %c101 = arith.constant 101 : index
    %151 = memref.load %arg1[%c101] : memref<141xf32, #tpu.memory_space<smem>>
    %152 = vector.broadcast %151 : f32 to vector<8x128xf32>
    %153 = arith.mulf %63, %152 : vector<8x128xf32>
    %154 = arith.addf %150, %153 : vector<8x128xf32>
    %c111 = arith.constant 111 : index
    %155 = memref.load %arg1[%c111] : memref<141xf32, #tpu.memory_space<smem>>
    %156 = vector.broadcast %155 : f32 to vector<8x128xf32>
    %157 = arith.mulf %70, %156 : vector<8x128xf32>
    %158 = arith.addf %154, %157 : vector<8x128xf32>
    %159 = math.tanh %158 : vector<8x128xf32>
    %c131 = arith.constant 131 : index
    %160 = memref.load %arg1[%c131] : memref<141xf32, #tpu.memory_space<smem>>
    %161 = vector.broadcast %160 : f32 to vector<8x128xf32>
    %162 = arith.mulf %159, %161 : vector<8x128xf32>
    %163 = arith.addf %116, %162 : vector<8x128xf32>
    %c22 = arith.constant 22 : index
    %164 = memref.load %arg1[%c22] : memref<141xf32, #tpu.memory_space<smem>>
    %165 = vector.broadcast %164 : f32 to vector<8x128xf32>
    %166 = arith.mulf %7, %165 : vector<8x128xf32>
    %c122 = arith.constant 122 : index
    %167 = memref.load %arg1[%c122] : memref<141xf32, #tpu.memory_space<smem>>
    %168 = vector.broadcast %167 : f32 to vector<8x128xf32>
    %169 = arith.addf %166, %168 : vector<8x128xf32>
    %c32 = arith.constant 32 : index
    %170 = memref.load %arg1[%c32] : memref<141xf32, #tpu.memory_space<smem>>
    %171 = vector.broadcast %170 : f32 to vector<8x128xf32>
    %172 = arith.mulf %14, %171 : vector<8x128xf32>
    %173 = arith.addf %169, %172 : vector<8x128xf32>
    %c42 = arith.constant 42 : index
    %174 = memref.load %arg1[%c42] : memref<141xf32, #tpu.memory_space<smem>>
    %175 = vector.broadcast %174 : f32 to vector<8x128xf32>
    %176 = arith.mulf %21, %175 : vector<8x128xf32>
    %177 = arith.addf %173, %176 : vector<8x128xf32>
    %c52 = arith.constant 52 : index
    %178 = memref.load %arg1[%c52] : memref<141xf32, #tpu.memory_space<smem>>
    %179 = vector.broadcast %178 : f32 to vector<8x128xf32>
    %180 = arith.mulf %28, %179 : vector<8x128xf32>
    %181 = arith.addf %177, %180 : vector<8x128xf32>
    %c62 = arith.constant 62 : index
    %182 = memref.load %arg1[%c62] : memref<141xf32, #tpu.memory_space<smem>>
    %183 = vector.broadcast %182 : f32 to vector<8x128xf32>
    %184 = arith.mulf %35, %183 : vector<8x128xf32>
    %185 = arith.addf %181, %184 : vector<8x128xf32>
    %c72 = arith.constant 72 : index
    %186 = memref.load %arg1[%c72] : memref<141xf32, #tpu.memory_space<smem>>
    %187 = vector.broadcast %186 : f32 to vector<8x128xf32>
    %188 = arith.mulf %42, %187 : vector<8x128xf32>
    %189 = arith.addf %185, %188 : vector<8x128xf32>
    %c82 = arith.constant 82 : index
    %190 = memref.load %arg1[%c82] : memref<141xf32, #tpu.memory_space<smem>>
    %191 = vector.broadcast %190 : f32 to vector<8x128xf32>
    %192 = arith.mulf %49, %191 : vector<8x128xf32>
    %193 = arith.addf %189, %192 : vector<8x128xf32>
    %c92 = arith.constant 92 : index
    %194 = memref.load %arg1[%c92] : memref<141xf32, #tpu.memory_space<smem>>
    %195 = vector.broadcast %194 : f32 to vector<8x128xf32>
    %196 = arith.mulf %56, %195 : vector<8x128xf32>
    %197 = arith.addf %193, %196 : vector<8x128xf32>
    %c102 = arith.constant 102 : index
    %198 = memref.load %arg1[%c102] : memref<141xf32, #tpu.memory_space<smem>>
    %199 = vector.broadcast %198 : f32 to vector<8x128xf32>
    %200 = arith.mulf %63, %199 : vector<8x128xf32>
    %201 = arith.addf %197, %200 : vector<8x128xf32>
    %c112 = arith.constant 112 : index
    %202 = memref.load %arg1[%c112] : memref<141xf32, #tpu.memory_space<smem>>
    %203 = vector.broadcast %202 : f32 to vector<8x128xf32>
    %204 = arith.mulf %70, %203 : vector<8x128xf32>
    %205 = arith.addf %201, %204 : vector<8x128xf32>
    %206 = math.tanh %205 : vector<8x128xf32>
    %c132 = arith.constant 132 : index
    %207 = memref.load %arg1[%c132] : memref<141xf32, #tpu.memory_space<smem>>
    %208 = vector.broadcast %207 : f32 to vector<8x128xf32>
    %209 = arith.mulf %206, %208 : vector<8x128xf32>
    %210 = arith.addf %163, %209 : vector<8x128xf32>
    %c23 = arith.constant 23 : index
    %211 = memref.load %arg1[%c23] : memref<141xf32, #tpu.memory_space<smem>>
    %212 = vector.broadcast %211 : f32 to vector<8x128xf32>
    %213 = arith.mulf %7, %212 : vector<8x128xf32>
    %c123 = arith.constant 123 : index
    %214 = memref.load %arg1[%c123] : memref<141xf32, #tpu.memory_space<smem>>
    %215 = vector.broadcast %214 : f32 to vector<8x128xf32>
    %216 = arith.addf %213, %215 : vector<8x128xf32>
    %c33 = arith.constant 33 : index
    %217 = memref.load %arg1[%c33] : memref<141xf32, #tpu.memory_space<smem>>
    %218 = vector.broadcast %217 : f32 to vector<8x128xf32>
    %219 = arith.mulf %14, %218 : vector<8x128xf32>
    %220 = arith.addf %216, %219 : vector<8x128xf32>
    %c43 = arith.constant 43 : index
    %221 = memref.load %arg1[%c43] : memref<141xf32, #tpu.memory_space<smem>>
    %222 = vector.broadcast %221 : f32 to vector<8x128xf32>
    %223 = arith.mulf %21, %222 : vector<8x128xf32>
    %224 = arith.addf %220, %223 : vector<8x128xf32>
    %c53 = arith.constant 53 : index
    %225 = memref.load %arg1[%c53] : memref<141xf32, #tpu.memory_space<smem>>
    %226 = vector.broadcast %225 : f32 to vector<8x128xf32>
    %227 = arith.mulf %28, %226 : vector<8x128xf32>
    %228 = arith.addf %224, %227 : vector<8x128xf32>
    %c63 = arith.constant 63 : index
    %229 = memref.load %arg1[%c63] : memref<141xf32, #tpu.memory_space<smem>>
    %230 = vector.broadcast %229 : f32 to vector<8x128xf32>
    %231 = arith.mulf %35, %230 : vector<8x128xf32>
    %232 = arith.addf %228, %231 : vector<8x128xf32>
    %c73 = arith.constant 73 : index
    %233 = memref.load %arg1[%c73] : memref<141xf32, #tpu.memory_space<smem>>
    %234 = vector.broadcast %233 : f32 to vector<8x128xf32>
    %235 = arith.mulf %42, %234 : vector<8x128xf32>
    %236 = arith.addf %232, %235 : vector<8x128xf32>
    %c83 = arith.constant 83 : index
    %237 = memref.load %arg1[%c83] : memref<141xf32, #tpu.memory_space<smem>>
    %238 = vector.broadcast %237 : f32 to vector<8x128xf32>
    %239 = arith.mulf %49, %238 : vector<8x128xf32>
    %240 = arith.addf %236, %239 : vector<8x128xf32>
    %c93 = arith.constant 93 : index
    %241 = memref.load %arg1[%c93] : memref<141xf32, #tpu.memory_space<smem>>
    %242 = vector.broadcast %241 : f32 to vector<8x128xf32>
    %243 = arith.mulf %56, %242 : vector<8x128xf32>
    %244 = arith.addf %240, %243 : vector<8x128xf32>
    %c103 = arith.constant 103 : index
    %245 = memref.load %arg1[%c103] : memref<141xf32, #tpu.memory_space<smem>>
    %246 = vector.broadcast %245 : f32 to vector<8x128xf32>
    %247 = arith.mulf %63, %246 : vector<8x128xf32>
    %248 = arith.addf %244, %247 : vector<8x128xf32>
    %c113 = arith.constant 113 : index
    %249 = memref.load %arg1[%c113] : memref<141xf32, #tpu.memory_space<smem>>
    %250 = vector.broadcast %249 : f32 to vector<8x128xf32>
    %251 = arith.mulf %70, %250 : vector<8x128xf32>
    %252 = arith.addf %248, %251 : vector<8x128xf32>
    %253 = math.tanh %252 : vector<8x128xf32>
    %c133 = arith.constant 133 : index
    %254 = memref.load %arg1[%c133] : memref<141xf32, #tpu.memory_space<smem>>
    %255 = vector.broadcast %254 : f32 to vector<8x128xf32>
    %256 = arith.mulf %253, %255 : vector<8x128xf32>
    %257 = arith.addf %210, %256 : vector<8x128xf32>
    %c24 = arith.constant 24 : index
    %258 = memref.load %arg1[%c24] : memref<141xf32, #tpu.memory_space<smem>>
    %259 = vector.broadcast %258 : f32 to vector<8x128xf32>
    %260 = arith.mulf %7, %259 : vector<8x128xf32>
    %c124 = arith.constant 124 : index
    %261 = memref.load %arg1[%c124] : memref<141xf32, #tpu.memory_space<smem>>
    %262 = vector.broadcast %261 : f32 to vector<8x128xf32>
    %263 = arith.addf %260, %262 : vector<8x128xf32>
    %c34 = arith.constant 34 : index
    %264 = memref.load %arg1[%c34] : memref<141xf32, #tpu.memory_space<smem>>
    %265 = vector.broadcast %264 : f32 to vector<8x128xf32>
    %266 = arith.mulf %14, %265 : vector<8x128xf32>
    %267 = arith.addf %263, %266 : vector<8x128xf32>
    %c44 = arith.constant 44 : index
    %268 = memref.load %arg1[%c44] : memref<141xf32, #tpu.memory_space<smem>>
    %269 = vector.broadcast %268 : f32 to vector<8x128xf32>
    %270 = arith.mulf %21, %269 : vector<8x128xf32>
    %271 = arith.addf %267, %270 : vector<8x128xf32>
    %c54 = arith.constant 54 : index
    %272 = memref.load %arg1[%c54] : memref<141xf32, #tpu.memory_space<smem>>
    %273 = vector.broadcast %272 : f32 to vector<8x128xf32>
    %274 = arith.mulf %28, %273 : vector<8x128xf32>
    %275 = arith.addf %271, %274 : vector<8x128xf32>
    %c64 = arith.constant 64 : index
    %276 = memref.load %arg1[%c64] : memref<141xf32, #tpu.memory_space<smem>>
    %277 = vector.broadcast %276 : f32 to vector<8x128xf32>
    %278 = arith.mulf %35, %277 : vector<8x128xf32>
    %279 = arith.addf %275, %278 : vector<8x128xf32>
    %c74 = arith.constant 74 : index
    %280 = memref.load %arg1[%c74] : memref<141xf32, #tpu.memory_space<smem>>
    %281 = vector.broadcast %280 : f32 to vector<8x128xf32>
    %282 = arith.mulf %42, %281 : vector<8x128xf32>
    %283 = arith.addf %279, %282 : vector<8x128xf32>
    %c84 = arith.constant 84 : index
    %284 = memref.load %arg1[%c84] : memref<141xf32, #tpu.memory_space<smem>>
    %285 = vector.broadcast %284 : f32 to vector<8x128xf32>
    %286 = arith.mulf %49, %285 : vector<8x128xf32>
    %287 = arith.addf %283, %286 : vector<8x128xf32>
    %c94 = arith.constant 94 : index
    %288 = memref.load %arg1[%c94] : memref<141xf32, #tpu.memory_space<smem>>
    %289 = vector.broadcast %288 : f32 to vector<8x128xf32>
    %290 = arith.mulf %56, %289 : vector<8x128xf32>
    %291 = arith.addf %287, %290 : vector<8x128xf32>
    %c104 = arith.constant 104 : index
    %292 = memref.load %arg1[%c104] : memref<141xf32, #tpu.memory_space<smem>>
    %293 = vector.broadcast %292 : f32 to vector<8x128xf32>
    %294 = arith.mulf %63, %293 : vector<8x128xf32>
    %295 = arith.addf %291, %294 : vector<8x128xf32>
    %c114 = arith.constant 114 : index
    %296 = memref.load %arg1[%c114] : memref<141xf32, #tpu.memory_space<smem>>
    %297 = vector.broadcast %296 : f32 to vector<8x128xf32>
    %298 = arith.mulf %70, %297 : vector<8x128xf32>
    %299 = arith.addf %295, %298 : vector<8x128xf32>
    %300 = math.tanh %299 : vector<8x128xf32>
    %c134 = arith.constant 134 : index
    %301 = memref.load %arg1[%c134] : memref<141xf32, #tpu.memory_space<smem>>
    %302 = vector.broadcast %301 : f32 to vector<8x128xf32>
    %303 = arith.mulf %300, %302 : vector<8x128xf32>
    %304 = arith.addf %257, %303 : vector<8x128xf32>
    %c25 = arith.constant 25 : index
    %305 = memref.load %arg1[%c25] : memref<141xf32, #tpu.memory_space<smem>>
    %306 = vector.broadcast %305 : f32 to vector<8x128xf32>
    %307 = arith.mulf %7, %306 : vector<8x128xf32>
    %c125 = arith.constant 125 : index
    %308 = memref.load %arg1[%c125] : memref<141xf32, #tpu.memory_space<smem>>
    %309 = vector.broadcast %308 : f32 to vector<8x128xf32>
    %310 = arith.addf %307, %309 : vector<8x128xf32>
    %c35 = arith.constant 35 : index
    %311 = memref.load %arg1[%c35] : memref<141xf32, #tpu.memory_space<smem>>
    %312 = vector.broadcast %311 : f32 to vector<8x128xf32>
    %313 = arith.mulf %14, %312 : vector<8x128xf32>
    %314 = arith.addf %310, %313 : vector<8x128xf32>
    %c45 = arith.constant 45 : index
    %315 = memref.load %arg1[%c45] : memref<141xf32, #tpu.memory_space<smem>>
    %316 = vector.broadcast %315 : f32 to vector<8x128xf32>
    %317 = arith.mulf %21, %316 : vector<8x128xf32>
    %318 = arith.addf %314, %317 : vector<8x128xf32>
    %c55 = arith.constant 55 : index
    %319 = memref.load %arg1[%c55] : memref<141xf32, #tpu.memory_space<smem>>
    %320 = vector.broadcast %319 : f32 to vector<8x128xf32>
    %321 = arith.mulf %28, %320 : vector<8x128xf32>
    %322 = arith.addf %318, %321 : vector<8x128xf32>
    %c65 = arith.constant 65 : index
    %323 = memref.load %arg1[%c65] : memref<141xf32, #tpu.memory_space<smem>>
    %324 = vector.broadcast %323 : f32 to vector<8x128xf32>
    %325 = arith.mulf %35, %324 : vector<8x128xf32>
    %326 = arith.addf %322, %325 : vector<8x128xf32>
    %c75 = arith.constant 75 : index
    %327 = memref.load %arg1[%c75] : memref<141xf32, #tpu.memory_space<smem>>
    %328 = vector.broadcast %327 : f32 to vector<8x128xf32>
    %329 = arith.mulf %42, %328 : vector<8x128xf32>
    %330 = arith.addf %326, %329 : vector<8x128xf32>
    %c85 = arith.constant 85 : index
    %331 = memref.load %arg1[%c85] : memref<141xf32, #tpu.memory_space<smem>>
    %332 = vector.broadcast %331 : f32 to vector<8x128xf32>
    %333 = arith.mulf %49, %332 : vector<8x128xf32>
    %334 = arith.addf %330, %333 : vector<8x128xf32>
    %c95 = arith.constant 95 : index
    %335 = memref.load %arg1[%c95] : memref<141xf32, #tpu.memory_space<smem>>
    %336 = vector.broadcast %335 : f32 to vector<8x128xf32>
    %337 = arith.mulf %56, %336 : vector<8x128xf32>
    %338 = arith.addf %334, %337 : vector<8x128xf32>
    %c105 = arith.constant 105 : index
    %339 = memref.load %arg1[%c105] : memref<141xf32, #tpu.memory_space<smem>>
    %340 = vector.broadcast %339 : f32 to vector<8x128xf32>
    %341 = arith.mulf %63, %340 : vector<8x128xf32>
    %342 = arith.addf %338, %341 : vector<8x128xf32>
    %c115 = arith.constant 115 : index
    %343 = memref.load %arg1[%c115] : memref<141xf32, #tpu.memory_space<smem>>
    %344 = vector.broadcast %343 : f32 to vector<8x128xf32>
    %345 = arith.mulf %70, %344 : vector<8x128xf32>
    %346 = arith.addf %342, %345 : vector<8x128xf32>
    %347 = math.tanh %346 : vector<8x128xf32>
    %c135 = arith.constant 135 : index
    %348 = memref.load %arg1[%c135] : memref<141xf32, #tpu.memory_space<smem>>
    %349 = vector.broadcast %348 : f32 to vector<8x128xf32>
    %350 = arith.mulf %347, %349 : vector<8x128xf32>
    %351 = arith.addf %304, %350 : vector<8x128xf32>
    %c26 = arith.constant 26 : index
    %352 = memref.load %arg1[%c26] : memref<141xf32, #tpu.memory_space<smem>>
    %353 = vector.broadcast %352 : f32 to vector<8x128xf32>
    %354 = arith.mulf %7, %353 : vector<8x128xf32>
    %c126 = arith.constant 126 : index
    %355 = memref.load %arg1[%c126] : memref<141xf32, #tpu.memory_space<smem>>
    %356 = vector.broadcast %355 : f32 to vector<8x128xf32>
    %357 = arith.addf %354, %356 : vector<8x128xf32>
    %c36 = arith.constant 36 : index
    %358 = memref.load %arg1[%c36] : memref<141xf32, #tpu.memory_space<smem>>
    %359 = vector.broadcast %358 : f32 to vector<8x128xf32>
    %360 = arith.mulf %14, %359 : vector<8x128xf32>
    %361 = arith.addf %357, %360 : vector<8x128xf32>
    %c46 = arith.constant 46 : index
    %362 = memref.load %arg1[%c46] : memref<141xf32, #tpu.memory_space<smem>>
    %363 = vector.broadcast %362 : f32 to vector<8x128xf32>
    %364 = arith.mulf %21, %363 : vector<8x128xf32>
    %365 = arith.addf %361, %364 : vector<8x128xf32>
    %c56 = arith.constant 56 : index
    %366 = memref.load %arg1[%c56] : memref<141xf32, #tpu.memory_space<smem>>
    %367 = vector.broadcast %366 : f32 to vector<8x128xf32>
    %368 = arith.mulf %28, %367 : vector<8x128xf32>
    %369 = arith.addf %365, %368 : vector<8x128xf32>
    %c66 = arith.constant 66 : index
    %370 = memref.load %arg1[%c66] : memref<141xf32, #tpu.memory_space<smem>>
    %371 = vector.broadcast %370 : f32 to vector<8x128xf32>
    %372 = arith.mulf %35, %371 : vector<8x128xf32>
    %373 = arith.addf %369, %372 : vector<8x128xf32>
    %c76 = arith.constant 76 : index
    %374 = memref.load %arg1[%c76] : memref<141xf32, #tpu.memory_space<smem>>
    %375 = vector.broadcast %374 : f32 to vector<8x128xf32>
    %376 = arith.mulf %42, %375 : vector<8x128xf32>
    %377 = arith.addf %373, %376 : vector<8x128xf32>
    %c86 = arith.constant 86 : index
    %378 = memref.load %arg1[%c86] : memref<141xf32, #tpu.memory_space<smem>>
    %379 = vector.broadcast %378 : f32 to vector<8x128xf32>
    %380 = arith.mulf %49, %379 : vector<8x128xf32>
    %381 = arith.addf %377, %380 : vector<8x128xf32>
    %c96 = arith.constant 96 : index
    %382 = memref.load %arg1[%c96] : memref<141xf32, #tpu.memory_space<smem>>
    %383 = vector.broadcast %382 : f32 to vector<8x128xf32>
    %384 = arith.mulf %56, %383 : vector<8x128xf32>
    %385 = arith.addf %381, %384 : vector<8x128xf32>
    %c106 = arith.constant 106 : index
    %386 = memref.load %arg1[%c106] : memref<141xf32, #tpu.memory_space<smem>>
    %387 = vector.broadcast %386 : f32 to vector<8x128xf32>
    %388 = arith.mulf %63, %387 : vector<8x128xf32>
    %389 = arith.addf %385, %388 : vector<8x128xf32>
    %c116 = arith.constant 116 : index
    %390 = memref.load %arg1[%c116] : memref<141xf32, #tpu.memory_space<smem>>
    %391 = vector.broadcast %390 : f32 to vector<8x128xf32>
    %392 = arith.mulf %70, %391 : vector<8x128xf32>
    %393 = arith.addf %389, %392 : vector<8x128xf32>
    %394 = math.tanh %393 : vector<8x128xf32>
    %c136 = arith.constant 136 : index
    %395 = memref.load %arg1[%c136] : memref<141xf32, #tpu.memory_space<smem>>
    %396 = vector.broadcast %395 : f32 to vector<8x128xf32>
    %397 = arith.mulf %394, %396 : vector<8x128xf32>
    %398 = arith.addf %351, %397 : vector<8x128xf32>
    %c27 = arith.constant 27 : index
    %399 = memref.load %arg1[%c27] : memref<141xf32, #tpu.memory_space<smem>>
    %400 = vector.broadcast %399 : f32 to vector<8x128xf32>
    %401 = arith.mulf %7, %400 : vector<8x128xf32>
    %c127 = arith.constant 127 : index
    %402 = memref.load %arg1[%c127] : memref<141xf32, #tpu.memory_space<smem>>
    %403 = vector.broadcast %402 : f32 to vector<8x128xf32>
    %404 = arith.addf %401, %403 : vector<8x128xf32>
    %c37 = arith.constant 37 : index
    %405 = memref.load %arg1[%c37] : memref<141xf32, #tpu.memory_space<smem>>
    %406 = vector.broadcast %405 : f32 to vector<8x128xf32>
    %407 = arith.mulf %14, %406 : vector<8x128xf32>
    %408 = arith.addf %404, %407 : vector<8x128xf32>
    %c47 = arith.constant 47 : index
    %409 = memref.load %arg1[%c47] : memref<141xf32, #tpu.memory_space<smem>>
    %410 = vector.broadcast %409 : f32 to vector<8x128xf32>
    %411 = arith.mulf %21, %410 : vector<8x128xf32>
    %412 = arith.addf %408, %411 : vector<8x128xf32>
    %c57 = arith.constant 57 : index
    %413 = memref.load %arg1[%c57] : memref<141xf32, #tpu.memory_space<smem>>
    %414 = vector.broadcast %413 : f32 to vector<8x128xf32>
    %415 = arith.mulf %28, %414 : vector<8x128xf32>
    %416 = arith.addf %412, %415 : vector<8x128xf32>
    %c67 = arith.constant 67 : index
    %417 = memref.load %arg1[%c67] : memref<141xf32, #tpu.memory_space<smem>>
    %418 = vector.broadcast %417 : f32 to vector<8x128xf32>
    %419 = arith.mulf %35, %418 : vector<8x128xf32>
    %420 = arith.addf %416, %419 : vector<8x128xf32>
    %c77 = arith.constant 77 : index
    %421 = memref.load %arg1[%c77] : memref<141xf32, #tpu.memory_space<smem>>
    %422 = vector.broadcast %421 : f32 to vector<8x128xf32>
    %423 = arith.mulf %42, %422 : vector<8x128xf32>
    %424 = arith.addf %420, %423 : vector<8x128xf32>
    %c87 = arith.constant 87 : index
    %425 = memref.load %arg1[%c87] : memref<141xf32, #tpu.memory_space<smem>>
    %426 = vector.broadcast %425 : f32 to vector<8x128xf32>
    %427 = arith.mulf %49, %426 : vector<8x128xf32>
    %428 = arith.addf %424, %427 : vector<8x128xf32>
    %c97 = arith.constant 97 : index
    %429 = memref.load %arg1[%c97] : memref<141xf32, #tpu.memory_space<smem>>
    %430 = vector.broadcast %429 : f32 to vector<8x128xf32>
    %431 = arith.mulf %56, %430 : vector<8x128xf32>
    %432 = arith.addf %428, %431 : vector<8x128xf32>
    %c107 = arith.constant 107 : index
    %433 = memref.load %arg1[%c107] : memref<141xf32, #tpu.memory_space<smem>>
    %434 = vector.broadcast %433 : f32 to vector<8x128xf32>
    %435 = arith.mulf %63, %434 : vector<8x128xf32>
    %436 = arith.addf %432, %435 : vector<8x128xf32>
    %c117 = arith.constant 117 : index
    %437 = memref.load %arg1[%c117] : memref<141xf32, #tpu.memory_space<smem>>
    %438 = vector.broadcast %437 : f32 to vector<8x128xf32>
    %439 = arith.mulf %70, %438 : vector<8x128xf32>
    %440 = arith.addf %436, %439 : vector<8x128xf32>
    %441 = math.tanh %440 : vector<8x128xf32>
    %c137 = arith.constant 137 : index
    %442 = memref.load %arg1[%c137] : memref<141xf32, #tpu.memory_space<smem>>
    %443 = vector.broadcast %442 : f32 to vector<8x128xf32>
    %444 = arith.mulf %441, %443 : vector<8x128xf32>
    %445 = arith.addf %398, %444 : vector<8x128xf32>
    %c28 = arith.constant 28 : index
    %446 = memref.load %arg1[%c28] : memref<141xf32, #tpu.memory_space<smem>>
    %447 = vector.broadcast %446 : f32 to vector<8x128xf32>
    %448 = arith.mulf %7, %447 : vector<8x128xf32>
    %c128 = arith.constant 128 : index
    %449 = memref.load %arg1[%c128] : memref<141xf32, #tpu.memory_space<smem>>
    %450 = vector.broadcast %449 : f32 to vector<8x128xf32>
    %451 = arith.addf %448, %450 : vector<8x128xf32>
    %c38 = arith.constant 38 : index
    %452 = memref.load %arg1[%c38] : memref<141xf32, #tpu.memory_space<smem>>
    %453 = vector.broadcast %452 : f32 to vector<8x128xf32>
    %454 = arith.mulf %14, %453 : vector<8x128xf32>
    %455 = arith.addf %451, %454 : vector<8x128xf32>
    %c48 = arith.constant 48 : index
    %456 = memref.load %arg1[%c48] : memref<141xf32, #tpu.memory_space<smem>>
    %457 = vector.broadcast %456 : f32 to vector<8x128xf32>
    %458 = arith.mulf %21, %457 : vector<8x128xf32>
    %459 = arith.addf %455, %458 : vector<8x128xf32>
    %c58 = arith.constant 58 : index
    %460 = memref.load %arg1[%c58] : memref<141xf32, #tpu.memory_space<smem>>
    %461 = vector.broadcast %460 : f32 to vector<8x128xf32>
    %462 = arith.mulf %28, %461 : vector<8x128xf32>
    %463 = arith.addf %459, %462 : vector<8x128xf32>
    %c68 = arith.constant 68 : index
    %464 = memref.load %arg1[%c68] : memref<141xf32, #tpu.memory_space<smem>>
    %465 = vector.broadcast %464 : f32 to vector<8x128xf32>
    %466 = arith.mulf %35, %465 : vector<8x128xf32>
    %467 = arith.addf %463, %466 : vector<8x128xf32>
    %c78 = arith.constant 78 : index
    %468 = memref.load %arg1[%c78] : memref<141xf32, #tpu.memory_space<smem>>
    %469 = vector.broadcast %468 : f32 to vector<8x128xf32>
    %470 = arith.mulf %42, %469 : vector<8x128xf32>
    %471 = arith.addf %467, %470 : vector<8x128xf32>
    %c88 = arith.constant 88 : index
    %472 = memref.load %arg1[%c88] : memref<141xf32, #tpu.memory_space<smem>>
    %473 = vector.broadcast %472 : f32 to vector<8x128xf32>
    %474 = arith.mulf %49, %473 : vector<8x128xf32>
    %475 = arith.addf %471, %474 : vector<8x128xf32>
    %c98 = arith.constant 98 : index
    %476 = memref.load %arg1[%c98] : memref<141xf32, #tpu.memory_space<smem>>
    %477 = vector.broadcast %476 : f32 to vector<8x128xf32>
    %478 = arith.mulf %56, %477 : vector<8x128xf32>
    %479 = arith.addf %475, %478 : vector<8x128xf32>
    %c108 = arith.constant 108 : index
    %480 = memref.load %arg1[%c108] : memref<141xf32, #tpu.memory_space<smem>>
    %481 = vector.broadcast %480 : f32 to vector<8x128xf32>
    %482 = arith.mulf %63, %481 : vector<8x128xf32>
    %483 = arith.addf %479, %482 : vector<8x128xf32>
    %c118 = arith.constant 118 : index
    %484 = memref.load %arg1[%c118] : memref<141xf32, #tpu.memory_space<smem>>
    %485 = vector.broadcast %484 : f32 to vector<8x128xf32>
    %486 = arith.mulf %70, %485 : vector<8x128xf32>
    %487 = arith.addf %483, %486 : vector<8x128xf32>
    %488 = math.tanh %487 : vector<8x128xf32>
    %c138 = arith.constant 138 : index
    %489 = memref.load %arg1[%c138] : memref<141xf32, #tpu.memory_space<smem>>
    %490 = vector.broadcast %489 : f32 to vector<8x128xf32>
    %491 = arith.mulf %488, %490 : vector<8x128xf32>
    %492 = arith.addf %445, %491 : vector<8x128xf32>
    %c29 = arith.constant 29 : index
    %493 = memref.load %arg1[%c29] : memref<141xf32, #tpu.memory_space<smem>>
    %494 = vector.broadcast %493 : f32 to vector<8x128xf32>
    %495 = arith.mulf %7, %494 : vector<8x128xf32>
    %c129 = arith.constant 129 : index
    %496 = memref.load %arg1[%c129] : memref<141xf32, #tpu.memory_space<smem>>
    %497 = vector.broadcast %496 : f32 to vector<8x128xf32>
    %498 = arith.addf %495, %497 : vector<8x128xf32>
    %c39 = arith.constant 39 : index
    %499 = memref.load %arg1[%c39] : memref<141xf32, #tpu.memory_space<smem>>
    %500 = vector.broadcast %499 : f32 to vector<8x128xf32>
    %501 = arith.mulf %14, %500 : vector<8x128xf32>
    %502 = arith.addf %498, %501 : vector<8x128xf32>
    %c49 = arith.constant 49 : index
    %503 = memref.load %arg1[%c49] : memref<141xf32, #tpu.memory_space<smem>>
    %504 = vector.broadcast %503 : f32 to vector<8x128xf32>
    %505 = arith.mulf %21, %504 : vector<8x128xf32>
    %506 = arith.addf %502, %505 : vector<8x128xf32>
    %c59 = arith.constant 59 : index
    %507 = memref.load %arg1[%c59] : memref<141xf32, #tpu.memory_space<smem>>
    %508 = vector.broadcast %507 : f32 to vector<8x128xf32>
    %509 = arith.mulf %28, %508 : vector<8x128xf32>
    %510 = arith.addf %506, %509 : vector<8x128xf32>
    %c69 = arith.constant 69 : index
    %511 = memref.load %arg1[%c69] : memref<141xf32, #tpu.memory_space<smem>>
    %512 = vector.broadcast %511 : f32 to vector<8x128xf32>
    %513 = arith.mulf %35, %512 : vector<8x128xf32>
    %514 = arith.addf %510, %513 : vector<8x128xf32>
    %c79 = arith.constant 79 : index
    %515 = memref.load %arg1[%c79] : memref<141xf32, #tpu.memory_space<smem>>
    %516 = vector.broadcast %515 : f32 to vector<8x128xf32>
    %517 = arith.mulf %42, %516 : vector<8x128xf32>
    %518 = arith.addf %514, %517 : vector<8x128xf32>
    %c89 = arith.constant 89 : index
    %519 = memref.load %arg1[%c89] : memref<141xf32, #tpu.memory_space<smem>>
    %520 = vector.broadcast %519 : f32 to vector<8x128xf32>
    %521 = arith.mulf %49, %520 : vector<8x128xf32>
    %522 = arith.addf %518, %521 : vector<8x128xf32>
    %c99 = arith.constant 99 : index
    %523 = memref.load %arg1[%c99] : memref<141xf32, #tpu.memory_space<smem>>
    %524 = vector.broadcast %523 : f32 to vector<8x128xf32>
    %525 = arith.mulf %56, %524 : vector<8x128xf32>
    %526 = arith.addf %522, %525 : vector<8x128xf32>
    %c109 = arith.constant 109 : index
    %527 = memref.load %arg1[%c109] : memref<141xf32, #tpu.memory_space<smem>>
    %528 = vector.broadcast %527 : f32 to vector<8x128xf32>
    %529 = arith.mulf %63, %528 : vector<8x128xf32>
    %530 = arith.addf %526, %529 : vector<8x128xf32>
    %c119 = arith.constant 119 : index
    %531 = memref.load %arg1[%c119] : memref<141xf32, #tpu.memory_space<smem>>
    %532 = vector.broadcast %531 : f32 to vector<8x128xf32>
    %533 = arith.mulf %70, %532 : vector<8x128xf32>
    %534 = arith.addf %530, %533 : vector<8x128xf32>
    %535 = math.tanh %534 : vector<8x128xf32>
    %c139 = arith.constant 139 : index
    %536 = memref.load %arg1[%c139] : memref<141xf32, #tpu.memory_space<smem>>
    %537 = vector.broadcast %536 : f32 to vector<8x128xf32>
    %538 = arith.mulf %535, %537 : vector<8x128xf32>
    %539 = arith.addf %492, %538 : vector<8x128xf32>
    %c140 = arith.constant 140 : index
    %540 = memref.load %arg1[%c140] : memref<141xf32, #tpu.memory_space<smem>>
    %541 = vector.broadcast %540 : f32 to vector<8x128xf32>
    %542 = arith.addf %539, %541 : vector<8x128xf32>
    %c0_2 = arith.constant 0 : index
    %c0_3 = arith.constant 0 : index
    %543 = vector.load %arg3[%c0_2, %c0_3] : memref<8x128xf32, #tpu.memory_space<vmem>>, vector<8x128xf32>
    tpu.vector_store %arg3[%c0_2, %c0_3], %542 {strides = array<i32>} : memref<8x128xf32, #tpu.memory_space<vmem>>, vector<8x128xf32>,
    return
  }
  func.func @transform_0(%arg0: i32) -> i32 {
    %c0_i32 = arith.constant 0 : i32
    %c0_i32_0 = arith.constant 0 : i32
    return %c0_i32 : i32
  }
  func.func @transform_1(%arg0: i32) -> (i32, i32) {
    %c0_i32 = arith.constant 0 : i32
    %c0_i32_0 = arith.constant 0 : i32
    return %arg0, %c0_i32 : i32, i32
  }
  func.func @transform_2(%arg0: i32) -> (i32, i32) {
    %c0_i32 = arith.constant 0 : i32
    %c0_i32_0 = arith.constant 0 : i32
    return %arg0, %c0_i32 : i32, i32
  }
}

</mosaic_0001>

<llo_original>
// kernel: tpu_custom_call.1
$region0: #{tpu_custom_call.1}
  #allocation0 [shape = 'u32[]', space=smem, size = 0x4, offset = 0x4, fixed_abs, tag = 'smem constant byte address 0x4 - core index']
  #allocation1 [shape = 'u32[144,128]{1,0:T(1,128)}', space=vmem, size = 0x12000, scoped, tag = 'internal scratch']
  %s0 = inlined_call_operand.hbm [shape: f32[141], index: 0, kind: input, shape index: {}]
  %s1 = inlined_call_operand.hbm [shape: f32[8,128], index: 1, kind: input, shape index: {}]
  %s2 = inlined_call_operand.hbm [shape: f32[8,128], index: 2, kind: output, shape index: {}]
  %s3 = sld [smem:[#allocation0]]
  $region26: #{tpu_custom_call.1} parent=0
    _
  %s5 = ssub.s32 1, %s3
  %s6 = scalar_select 0, %s5, %s3
  $region1: #{tpu_custom_call.1} parent=0
    #allocation2 [shape = 'u8[1024]{0}', space=smem, size = 0x400, scoped, tag = 'input window, operand 0, single buffered']
    #allocation3 [shape = 's32[1]{0}', space=sflag, size = 0x4, scoped, tag = 'scoped memory for tpu_custom_call.1']
    #allocation4 [shape = 's32[1]{0}', space=sflag, size = 0x4, scoped, tag = 'scoped memory for tpu_custom_call.1']
    #allocation5 [shape = 's32[1]{0}', space=sflag, size = 0x4, scoped, tag = 'scoped memory for tpu_custom_call.1']
    #allocation6 [shape = 'u8[4096]{0}', space=vmem, size = 0x1000, scoped, tag = 'input window, operand 1, single buffered']
    #allocation7 [shape = 'u8[4096]{0}', space=vmem, size = 0x1000, scoped, tag = 'output window, operand 0, single buffered']
    %7 = vsyncpa [#allocation5], 0
    %8 = vsyncpa [#allocation3], 0
    %9 = vsyncpa [#allocation4], 0
    // Predicated region
    $region2: #{tpu_custom_call.1} parent=1 // pred_check
      _
    $region3: #{tpu_custom_call.1} parent=1 // pred_check_branch
      %11 = sbr.rel (0) target = $region5
    $region4: #{tpu_custom_call.1} parent=1 // pred_region
      %s13 = ssub.s32 32, 32
      %14 = vsyncadd [#allocation5], %s13
      %17 = dma.hbm_to_smem %s0, 32, [#allocation2], [#allocation5]
    $region5: #{tpu_custom_call.1} parent=1 // pred_fallthru
      _
    // Predicated region
    $region6: #{tpu_custom_call.1} parent=1 // pred_check
      _
    $region7: #{tpu_custom_call.1} parent=1 // pred_check_branch
      %19 = sbr.rel (0) target = $region9
    $region8: #{tpu_custom_call.1} parent=1 // pred_region
      %s21 = ssub.s32 128, 128
      %22 = vsyncadd [#allocation3], %s21
      %s24 = sshll.u32 [#allocation6], 4
      %s25 = int_to_ptr.vmem [resolvable:$true] %s24
      %27 = dma.hbm_to_vmem [thread:$0]  %s1, 128, %s25, [#allocation3]
    $region9: #{tpu_custom_call.1} parent=1 // pred_fallthru
      _
    // Predicated region
    $region10: #{tpu_custom_call.1} parent=1 // pred_check
      _
    $region11: #{tpu_custom_call.1} parent=1 // pred_check_branch
      %29 = sbr.rel (0) target = $region13
    $region12: #{tpu_custom_call.1} parent=1 // pred_region
      %30 = dma.done [#allocation5], 32
    $region13: #{tpu_custom_call.1} parent=1 // pred_fallthru
      _
    // Predicated region
    $region14: #{tpu_custom_call.1} parent=1 // pred_check
      _
    $region15: #{tpu_custom_call.1} parent=1 // pred_check_branch
      %32 = sbr.rel (0) target = $region17
    $region16: #{tpu_custom_call.1} parent=1 // pred_region
      %33 = dma.done [#allocation3], 128
    $region17: #{tpu_custom_call.1} parent=1 // pred_fallthru
      _
    %34 = sfence
    %v35 = vld [vmem:[#allocation6] sm:$0xff]
    %s36 = sld [smem:[#allocation2]]
    %v37 = vstv %s36
    %v38 = vmul.f32 %v35, %v37
    %s39 = sld [smem:[#allocation2 + $0xa]]
    %v40 = vstv %s39
    %v41 = vadd.f32 %v38, %v40
    %v42 = vtanh.pop %v41
    %s43 = sld [smem:[#allocation2 + $0x1]]
    %v44 = vstv %s43
    %v45 = vmul.f32 %v35, %v44
    %s46 = sld [smem:[#allocation2 + $0xb]]
    %v47 = vstv %s46
    %v48 = vadd.f32 %v45, %v47
    %v49 = vtanh.pop %v48
    %s50 = sld [smem:[#allocation2 + $0x2]]
    %v51 = vstv %s50
    %v52 = vmul.f32 %v35, %v51
    %s53 = sld [smem:[#allocation2 + $0xc]]
    %v54 = vstv %s53
    %v55 = vadd.f32 %v52, %v54
    %v56 = vtanh.pop %v55
    %s57 = sld [smem:[#allocation2 + $0x3]]
    %v58 = vstv %s57
    %v59 = vmul.f32 %v35, %v58
    %s60 = sld [smem:[#allocation2 + $0xd]]
    %v61 = vstv %s60
    %v62 = vadd.f32 %v59, %v61
    %v63 = vtanh.pop %v62
    %s64 = sld [smem:[#allocation2 + $0x4]]
    %v65 = vstv %s64
    %v66 = vmul.f32 %v35, %v65
    %s67 = sld [smem:[#allocation2 + $0xe]]
    %v68 = vstv %s67
    %v69 = vadd.f32 %v66, %v68
    %v70 = vtanh.pop %v69
    %s71 = sld [smem:[#allocation2 + $0x5]]
    %v72 = vstv %s71
    %v73 = vmul.f32 %v35, %v72
    %s74 = sld [smem:[#allocation2 + $0xf]]
    %v75 = vstv %s74
    %v76 = vadd.f32 %v73, %v75
    %v77 = vtanh.pop %v76
    %s78 = sld [smem:[#allocation2 + $0x6]]
    %v79 = vstv %s78
    %v80 = vmul.f32 %v35, %v79
    %s81 = sld [smem:[#allocation2 + $0x10]]
    %v82 = vstv %s81
    %v83 = vadd.f32 %v80, %v82
    %v84 = vtanh.pop %v83
    %s85 = sld [smem:[#allocation2 + $0x7]]
    %v86 = vstv %s85
    %v87 = vmul.f32 %v35, %v86
    %s88 = sld [smem:[#allocation2 + $0x11]]
    %v89 = vstv %s88
    %v90 = vadd.f32 %v87, %v89
    %v91 = vtanh.pop %v90
    %s92 = sld [smem:[#allocation2 + $0x8]]
    %v93 = vstv %s92
    %v94 = vmul.f32 %v35, %v93
    %s95 = sld [smem:[#allocation2 + $0x12]]
    %v96 = vstv %s95
    %v97 = vadd.f32 %v94, %v96
    %v98 = vtanh.pop %v97
    %s99 = sld [smem:[#allocation2 + $0x9]]
    %v100 = vstv %s99
    %v101 = vmul.f32 %v35, %v100
    %s102 = sld [smem:[#allocation2 + $0x13]]
    %v103 = vstv %s102
    %v104 = vadd.f32 %v101, %v103
    %v105 = vtanh.pop %v104
    %s106 = sld [smem:[#allocation2 + $0x14]]
    %v107 = vstv %s106
    %v108 = vmul.f32 %v42, %v107
    %s109 = sld [smem:[#allocation2 + $0x78]]
    %v110 = vstv %s109
    %v111 = vadd.f32 %v108, %v110
    %s112 = sld [smem:[#allocation2 + $0x1e]]
    %v113 = vstv %s112
    %v114 = vmul.f32 %v49, %v113
    %v115 = vadd.f32 %v111, %v114
    %s116 = sld [smem:[#allocation2 + $0x28]]
    %v117 = vstv %s116
    %v118 = vmul.f32 %v56, %v117
    %v119 = vadd.f32 %v115, %v118
    %s120 = sld [smem:[#allocation2 + $0x32]]
    %v121 = vstv %s120
    %v122 = vmul.f32 %v63, %v121
    %v123 = vadd.f32 %v119, %v122
    %s124 = sld [smem:[#allocation2 + $0x3c]]
    %v125 = vstv %s124
    %v126 = vmul.f32 %v70, %v125
    %v127 = vadd.f32 %v123, %v126
    %s128 = sld [smem:[#allocation2 + $0x46]]
    %v129 = vstv %s128
    %v130 = vmul.f32 %v77, %v129
    %v131 = vadd.f32 %v127, %v130
    %s132 = sld [smem:[#allocation2 + $0x50]]
    %v133 = vstv %s132
    %v134 = vmul.f32 %v84, %v133
    %v135 = vadd.f32 %v131, %v134
    %s136 = sld [smem:[#allocation2 + $0x5a]]
    %v137 = vstv %s136
    %v138 = vmul.f32 %v91, %v137
    %v139 = vadd.f32 %v135, %v138
    %s140 = sld [smem:[#allocation2 + $0x64]]
    %v141 = vstv %s140
    %v142 = vmul.f32 %v98, %v141
    %v143 = vadd.f32 %v139, %v142
    %s144 = sld [smem:[#allocation2 + $0x6e]]
    %v145 = vstv %s144
    %v146 = vmul.f32 %v105, %v145
    %v147 = vadd.f32 %v143, %v146
    %v148 = vtanh.pop %v147
    %s149 = sld [smem:[#allocation2 + $0x82]]
    %v150 = vstv %s149
    %v151 = vmul.f32 %v148, %v150
    %s152 = sld [smem:[#allocation2 + $0x15]]
    %v153 = vstv %s152
    %v154 = vmul.f32 %v42, %v153
    %s155 = sld [smem:[#allocation2 + $0x79]]
    %v156 = vstv %s155
    %v157 = vadd.f32 %v154, %v156
    %s158 = sld [smem:[#allocation2 + $0x1f]]
    %v159 = vstv %s158
    %v160 = vmul.f32 %v49, %v159
    %v161 = vadd.f32 %v157, %v160
    %s162 = sld [smem:[#allocation2 + $0x29]]
    %v163 = vstv %s162
    %v164 = vmul.f32 %v56, %v163
    %v165 = vadd.f32 %v161, %v164
    %s166 = sld [smem:[#allocation2 + $0x33]]
    %v167 = vstv %s166
    %v168 = vmul.f32 %v63, %v167
    %v169 = vadd.f32 %v165, %v168
    %s170 = sld [smem:[#allocation2 + $0x3d]]
    %v171 = vstv %s170
    %v172 = vmul.f32 %v70, %v171
    %v173 = vadd.f32 %v169, %v172
    %s174 = sld [smem:[#allocation2 + $0x47]]
    %v175 = vstv %s174
    %v176 = vmul.f32 %v77, %v175
    %v177 = vadd.f32 %v173, %v176
    %s178 = sld [smem:[#allocation2 + $0x51]]
    %v179 = vstv %s178
    %v180 = vmul.f32 %v84, %v179
    %v181 = vadd.f32 %v177, %v180
    %s182 = sld [smem:[#allocation2 + $0x5b]]
    %v183 = vstv %s182
    %v184 = vmul.f32 %v91, %v183
    %v185 = vadd.f32 %v181, %v184
    %s186 = sld [smem:[#allocation2 + $0x65]]
    %v187 = vstv %s186
    %v188 = vmul.f32 %v98, %v187
    %v189 = vadd.f32 %v185, %v188
    %s190 = sld [smem:[#allocation2 + $0x6f]]
    %v191 = vstv %s190
    %v192 = vmul.f32 %v105, %v191
    %v193 = vadd.f32 %v189, %v192
    %v194 = vtanh.pop %v193
    %s195 = sld [smem:[#allocation2 + $0x83]]
    %v196 = vstv %s195
    %v197 = vmul.f32 %v194, %v196
    %v198 = vadd.f32 %v151, %v197
    %s199 = sld [smem:[#allocation2 + $0x16]]
    %v200 = vstv %s199
    %v201 = vmul.f32 %v42, %v200
    %s202 = sld [smem:[#allocation2 + $0x7a]]
    %v203 = vstv %s202
    %v204 = vadd.f32 %v201, %v203
    %s205 = sld [smem:[#allocation2 + $0x20]]
    %v206 = vstv %s205
    %v207 = vmul.f32 %v49, %v206
    %v208 = vadd.f32 %v204, %v207
    %s209 = sld [smem:[#allocation2 + $0x2a]]
    %v210 = vstv %s209
    %v211 = vmul.f32 %v56, %v210
    %v212 = vadd.f32 %v208, %v211
    %s213 = sld [smem:[#allocation2 + $0x34]]
    %v214 = vstv %s213
    %v215 = vmul.f32 %v63, %v214
    %v216 = vadd.f32 %v212, %v215
    %s217 = sld [smem:[#allocation2 + $0x3e]]
    %v218 = vstv %s217
    %v219 = vmul.f32 %v70, %v218
    %v220 = vadd.f32 %v216, %v219
    %s221 = sld [smem:[#allocation2 + $0x48]]
    %v222 = vstv %s221
    %v223 = vmul.f32 %v77, %v222
    %v224 = vadd.f32 %v220, %v223
    %s225 = sld [smem:[#allocation2 + $0x52]]
    %v226 = vstv %s225
    %v227 = vmul.f32 %v84, %v226
    %v228 = vadd.f32 %v224, %v227
    %s229 = sld [smem:[#allocation2 + $0x5c]]
    %v230 = vstv %s229
    %v231 = vmul.f32 %v91, %v230
    %v232 = vadd.f32 %v228, %v231
    %s233 = sld [smem:[#allocation2 + $0x66]]
    %v234 = vstv %s233
    %v235 = vmul.f32 %v98, %v234
    %v236 = vadd.f32 %v232, %v235
    %s237 = sld [smem:[#allocation2 + $0x70]]
    %v238 = vstv %s237
    %v239 = vmul.f32 %v105, %v238
    %v240 = vadd.f32 %v236, %v239
    %v241 = vtanh.pop %v240
    %s242 = sld [smem:[#allocation2 + $0x84]]
    %v243 = vstv %s242
    %v244 = vmul.f32 %v241, %v243
    %v245 = vadd.f32 %v198, %v244
    %s246 = sld [smem:[#allocation2 + $0x17]]
    %v247 = vstv %s246
    %v248 = vmul.f32 %v42, %v247
    %s249 = sld [smem:[#allocation2 + $0x7b]]
    %v250 = vstv %s249
    %v251 = vadd.f32 %v248, %v250
    %s252 = sld [smem:[#allocation2 + $0x21]]
    %v253 = vstv %s252
    %v254 = vmul.f32 %v49, %v253
    %v255 = vadd.f32 %v251, %v254
    %s256 = sld [smem:[#allocation2 + $0x2b]]
    %v257 = vstv %s256
    %v258 = vmul.f32 %v56, %v257
    %v259 = vadd.f32 %v255, %v258
    %s260 = sld [smem:[#allocation2 + $0x35]]
    %v261 = vstv %s260
    %v262 = vmul.f32 %v63, %v261
    %v263 = vadd.f32 %v259, %v262
    %s264 = sld [smem:[#allocation2 + $0x3f]]
    %v265 = vstv %s264
    %v266 = vmul.f32 %v70, %v265
    %v267 = vadd.f32 %v263, %v266
    %s268 = sld [smem:[#allocation2 + $0x49]]
    %v269 = vstv %s268
    %v270 = vmul.f32 %v77, %v269
    %v271 = vadd.f32 %v267, %v270
    %s272 = sld [smem:[#allocation2 + $0x53]]
    %v273 = vstv %s272
    %v274 = vmul.f32 %v84, %v273
    %v275 = vadd.f32 %v271, %v274
    %s276 = sld [smem:[#allocation2 + $0x5d]]
    %v277 = vstv %s276
    %v278 = vmul.f32 %v91, %v277
    %v279 = vadd.f32 %v275, %v278
    %s280 = sld [smem:[#allocation2 + $0x67]]
    %v281 = vstv %s280
    %v282 = vmul.f32 %v98, %v281
    %v283 = vadd.f32 %v279, %v282
    %s284 = sld [smem:[#allocation2 + $0x71]]
    %v285 = vstv %s284
    %v286 = vmul.f32 %v105, %v285
    %v287 = vadd.f32 %v283, %v286
    %v288 = vtanh.pop %v287
    %s289 = sld [smem:[#allocation2 + $0x85]]
    %v290 = vstv %s289
    %v291 = vmul.f32 %v288, %v290
    %v292 = vadd.f32 %v245, %v291
    %s293 = sld [smem:[#allocation2 + $0x18]]
    %v294 = vstv %s293
    %v295 = vmul.f32 %v42, %v294
    %s296 = sld [smem:[#allocation2 + $0x7c]]
    %v297 = vstv %s296
    %v298 = vadd.f32 %v295, %v297
    %s299 = sld [smem:[#allocation2 + $0x22]]
    %v300 = vstv %s299
    %v301 = vmul.f32 %v49, %v300
    %v302 = vadd.f32 %v298, %v301
    %s303 = sld [smem:[#allocation2 + $0x2c]]
    %v304 = vstv %s303
    %v305 = vmul.f32 %v56, %v304
    %v306 = vadd.f32 %v302, %v305
    %s307 = sld [smem:[#allocation2 + $0x36]]
    %v308 = vstv %s307
    %v309 = vmul.f32 %v63, %v308
    %v310 = vadd.f32 %v306, %v309
    %s311 = sld [smem:[#allocation2 + $0x40]]
    %v312 = vstv %s311
    %v313 = vmul.f32 %v70, %v312
    %v314 = vadd.f32 %v310, %v313
    %s315 = sld [smem:[#allocation2 + $0x4a]]
    %v316 = vstv %s315
    %v317 = vmul.f32 %v77, %v316
    %v318 = vadd.f32 %v314, %v317
    %s319 = sld [smem:[#allocation2 + $0x54]]
    %v320 = vstv %s319
    %v321 = vmul.f32 %v84, %v320
    %v322 = vadd.f32 %v318, %v321
    %s323 = sld [smem:[#allocation2 + $0x5e]]
    %v324 = vstv %s323
    %v325 = vmul.f32 %v91, %v324
    %v326 = vadd.f32 %v322, %v325
    %s327 = sld [smem:[#allocation2 + $0x68]]
    %v328 = vstv %s327
    %v329 = vmul.f32 %v98, %v328
    %v330 = vadd.f32 %v326, %v329
    %s331 = sld [smem:[#allocation2 + $0x72]]
    %v332 = vstv %s331
    %v333 = vmul.f32 %v105, %v332
    %v334 = vadd.f32 %v330, %v333
    %v335 = vtanh.pop %v334
    %s336 = sld [smem:[#allocation2 + $0x86]]
    %v337 = vstv %s336
    %v338 = vmul.f32 %v335, %v337
    %v339 = vadd.f32 %v292, %v338
    %s340 = sld [smem:[#allocation2 + $0x19]]
    %v341 = vstv %s340
    %v342 = vmul.f32 %v42, %v341
    %s343 = sld [smem:[#allocation2 + $0x7d]]
    %v344 = vstv %s343
    %v345 = vadd.f32 %v342, %v344
    %s346 = sld [smem:[#allocation2 + $0x23]]
    %v347 = vstv %s346
    %v348 = vmul.f32 %v49, %v347
    %v349 = vadd.f32 %v345, %v348
    %s350 = sld [smem:[#allocation2 + $0x2d]]
    %v351 = vstv %s350
    %v352 = vmul.f32 %v56, %v351
    %v353 = vadd.f32 %v349, %v352
    %s354 = sld [smem:[#allocation2 + $0x37]]
    %v355 = vstv %s354
    %v356 = vmul.f32 %v63, %v355
    %v357 = vadd.f32 %v353, %v356
    %s358 = sld [smem:[#allocation2 + $0x41]]
    %v359 = vstv %s358
    %v360 = vmul.f32 %v70, %v359
    %v361 = vadd.f32 %v357, %v360
    %s362 = sld [smem:[#allocation2 + $0x4b]]
    %v363 = vstv %s362
    %v364 = vmul.f32 %v77, %v363
    %v365 = vadd.f32 %v361, %v364
    %s366 = sld [smem:[#allocation2 + $0x55]]
    %v367 = vstv %s366
    %v368 = vmul.f32 %v84, %v367
    %v369 = vadd.f32 %v365, %v368
    %s370 = sld [smem:[#allocation2 + $0x5f]]
    %v371 = vstv %s370
    %v372 = vmul.f32 %v91, %v371
    %v373 = vadd.f32 %v369, %v372
    %s374 = sld [smem:[#allocation2 + $0x69]]
    %v375 = vstv %s374
    %v376 = vmul.f32 %v98, %v375
    %v377 = vadd.f32 %v373, %v376
    %s378 = sld [smem:[#allocation2 + $0x73]]
    %v379 = vstv %s378
    %v380 = vmul.f32 %v105, %v379
    %v381 = vadd.f32 %v377, %v380
    %v382 = vtanh.pop %v381
    %s383 = sld [smem:[#allocation2 + $0x87]]
    %v384 = vstv %s383
    %v385 = vmul.f32 %v382, %v384
    %v386 = vadd.f32 %v339, %v385
    %s387 = sld [smem:[#allocation2 + $0x1a]]
    %v388 = vstv %s387
    %v389 = vmul.f32 %v42, %v388
    %s390 = sld [smem:[#allocation2 + $0x7e]]
    %v391 = vstv %s390
    %v392 = vadd.f32 %v389, %v391
    %s393 = sld [smem:[#allocation2 + $0x24]]
    %v394 = vstv %s393
    %v395 = vmul.f32 %v49, %v394
    %v396 = vadd.f32 %v392, %v395
    %s397 = sld [smem:[#allocation2 + $0x2e]]
    %v398 = vstv %s397
    %v399 = vmul.f32 %v56, %v398
    %v400 = vadd.f32 %v396, %v399
    %s401 = sld [smem:[#allocation2 + $0x38]]
    %v402 = vstv %s401
    %v403 = vmul.f32 %v63, %v402
    %v404 = vadd.f32 %v400, %v403
    %s405 = sld [smem:[#allocation2 + $0x42]]
    %v406 = vstv %s405
    %v407 = vmul.f32 %v70, %v406
    %v408 = vadd.f32 %v404, %v407
    %s409 = sld [smem:[#allocation2 + $0x4c]]
    %v410 = vstv %s409
    %v411 = vmul.f32 %v77, %v410
    %v412 = vadd.f32 %v408, %v411
    %s413 = sld [smem:[#allocation2 + $0x56]]
    %v414 = vstv %s413
    %v415 = vmul.f32 %v84, %v414
    %v416 = vadd.f32 %v412, %v415
    %s417 = sld [smem:[#allocation2 + $0x60]]
    %v418 = vstv %s417
    %v419 = vmul.f32 %v91, %v418
    %v420 = vadd.f32 %v416, %v419
    %s421 = sld [smem:[#allocation2 + $0x6a]]
    %v422 = vstv %s421
    %v423 = vmul.f32 %v98, %v422
    %v424 = vadd.f32 %v420, %v423
    %s425 = sld [smem:[#allocation2 + $0x74]]
    %v426 = vstv %s425
    %v427 = vmul.f32 %v105, %v426
    %v428 = vadd.f32 %v424, %v427
    %v429 = vtanh.pop %v428
    %s430 = sld [smem:[#allocation2 + $0x88]]
    %v431 = vstv %s430
    %v432 = vmul.f32 %v429, %v431
    %v433 = vadd.f32 %v386, %v432
    %s434 = sld [smem:[#allocation2 + $0x1b]]
    %v435 = vstv %s434
    %v436 = vmul.f32 %v42, %v435
    %s437 = sld [smem:[#allocation2 + $0x7f]]
    %v438 = vstv %s437
    %v439 = vadd.f32 %v436, %v438
    %s440 = sld [smem:[#allocation2 + $0x25]]
    %v441 = vstv %s440
    %v442 = vmul.f32 %v49, %v441
    %v443 = vadd.f32 %v439, %v442
    %s444 = sld [smem:[#allocation2 + $0x2f]]
    %v445 = vstv %s444
    %v446 = vmul.f32 %v56, %v445
    %v447 = vadd.f32 %v443, %v446
    %s448 = sld [smem:[#allocation2 + $0x39]]
    %v449 = vstv %s448
    %v450 = vmul.f32 %v63, %v449
    %v451 = vadd.f32 %v447, %v450
    %s452 = sld [smem:[#allocation2 + $0x43]]
    %v453 = vstv %s452
    %v454 = vmul.f32 %v70, %v453
    %v455 = vadd.f32 %v451, %v454
    %s456 = sld [smem:[#allocation2 + $0x4d]]
    %v457 = vstv %s456
    %v458 = vmul.f32 %v77, %v457
    %v459 = vadd.f32 %v455, %v458
    %s460 = sld [smem:[#allocation2 + $0x57]]
    %v461 = vstv %s460
    %v462 = vmul.f32 %v84, %v461
    %v463 = vadd.f32 %v459, %v462
    %s464 = sld [smem:[#allocation2 + $0x61]]
    %v465 = vstv %s464
    %v466 = vmul.f32 %v91, %v465
    %v467 = vadd.f32 %v463, %v466
    %s468 = sld [smem:[#allocation2 + $0x6b]]
    %v469 = vstv %s468
    %v470 = vmul.f32 %v98, %v469
    %v471 = vadd.f32 %v467, %v470
    %s472 = sld [smem:[#allocation2 + $0x75]]
    %v473 = vstv %s472
    %v474 = vmul.f32 %v105, %v473
    %v475 = vadd.f32 %v471, %v474
    %v476 = vtanh.pop %v475
    %s477 = sld [smem:[#allocation2 + $0x89]]
    %v478 = vstv %s477
    %v479 = vmul.f32 %v476, %v478
    %v480 = vadd.f32 %v433, %v479
    %s481 = sld [smem:[#allocation2 + $0x1c]]
    %v482 = vstv %s481
    %v483 = vmul.f32 %v42, %v482
    %s484 = sld [smem:[#allocation2 + $0x80]]
    %v485 = vstv %s484
    %v486 = vadd.f32 %v483, %v485
    %s487 = sld [smem:[#allocation2 + $0x26]]
    %v488 = vstv %s487
    %v489 = vmul.f32 %v49, %v488
    %v490 = vadd.f32 %v486, %v489
    %s491 = sld [smem:[#allocation2 + $0x30]]
    %v492 = vstv %s491
    %v493 = vmul.f32 %v56, %v492
    %v494 = vadd.f32 %v490, %v493
    %s495 = sld [smem:[#allocation2 + $0x3a]]
    %v496 = vstv %s495
    %v497 = vmul.f32 %v63, %v496
    %v498 = vadd.f32 %v494, %v497
    %s499 = sld [smem:[#allocation2 + $0x44]]
    %v500 = vstv %s499
    %v501 = vmul.f32 %v70, %v500
    %v502 = vadd.f32 %v498, %v501
    %s503 = sld [smem:[#allocation2 + $0x4e]]
    %v504 = vstv %s503
    %v505 = vmul.f32 %v77, %v504
    %v506 = vadd.f32 %v502, %v505
    %s507 = sld [smem:[#allocation2 + $0x58]]
    %v508 = vstv %s507
    %v509 = vmul.f32 %v84, %v508
    %v510 = vadd.f32 %v506, %v509
    %s511 = sld [smem:[#allocation2 + $0x62]]
    %v512 = vstv %s511
    %v513 = vmul.f32 %v91, %v512
    %v514 = vadd.f32 %v510, %v513
    %s515 = sld [smem:[#allocation2 + $0x6c]]
    %v516 = vstv %s515
    %v517 = vmul.f32 %v98, %v516
    %v518 = vadd.f32 %v514, %v517
    %s519 = sld [smem:[#allocation2 + $0x76]]
    %v520 = vstv %s519
    %v521 = vmul.f32 %v105, %v520
    %v522 = vadd.f32 %v518, %v521
    %v523 = vtanh.pop %v522
    %s524 = sld [smem:[#allocation2 + $0x8a]]
    %v525 = vstv %s524
    %v526 = vmul.f32 %v523, %v525
    %v527 = vadd.f32 %v480, %v526
    %s528 = sld [smem:[#allocation2 + $0x1d]]
    %v529 = vstv %s528
    %v530 = vmul.f32 %v42, %v529
    %s531 = sld [smem:[#allocation2 + $0x81]]
    %v532 = vstv %s531
    %v533 = vadd.f32 %v530, %v532
    %s534 = sld [smem:[#allocation2 + $0x27]]
    %v535 = vstv %s534
    %v536 = vmul.f32 %v49, %v535
    %v537 = vadd.f32 %v533, %v536
    %s538 = sld [smem:[#allocation2 + $0x31]]
    %v539 = vstv %s538
    %v540 = vmul.f32 %v56, %v539
    %v541 = vadd.f32 %v537, %v540
    %s542 = sld [smem:[#allocation2 + $0x3b]]
    %v543 = vstv %s542
    %v544 = vmul.f32 %v63, %v543
    %v545 = vadd.f32 %v541, %v544
    %s546 = sld [smem:[#allocation2 + $0x45]]
    %v547 = vstv %s546
    %v548 = vmul.f32 %v70, %v547
    %v549 = vadd.f32 %v545, %v548
    %s550 = sld [smem:[#allocation2 + $0x4f]]
    %v551 = vstv %s550
    %v552 = vmul.f32 %v77, %v551
    %v553 = vadd.f32 %v549, %v552
    %s554 = sld [smem:[#allocation2 + $0x59]]
    %v555 = vstv %s554
    %v556 = vmul.f32 %v84, %v555
    %v557 = vadd.f32 %v553, %v556
    %s558 = sld [smem:[#allocation2 + $0x63]]
    %v559 = vstv %s558
    %v560 = vmul.f32 %v91, %v559
    %v561 = vadd.f32 %v557, %v560
    %s562 = sld [smem:[#allocation2 + $0x6d]]
    %v563 = vstv %s562
    %v564 = vmul.f32 %v98, %v563
    %v565 = vadd.f32 %v561, %v564
    %s566 = sld [smem:[#allocation2 + $0x77]]
    %v567 = vstv %s566
    %v568 = vmul.f32 %v105, %v567
    %v569 = vadd.f32 %v565, %v568
    %v570 = vtanh.pop %v569
    %s571 = sld [smem:[#allocation2 + $0x8b]]
    %v572 = vstv %s571
    %v573 = vmul.f32 %v570, %v572
    %v574 = vadd.f32 %v527, %v573
    %s575 = sld [smem:[#allocation2 + $0x8c]]
    %v576 = vstv %s575
    %v577 = vadd.f32 %v574, %v576
    %578 = vst [vmem:[#allocation7] sm:$0xff] %v577
    // Predicated region
    $region18: #{tpu_custom_call.1} parent=1 // pred_check
      _
    $region19: #{tpu_custom_call.1} parent=1 // pred_check_branch
      %580 = sbr.rel (0) target = $region21
    $region20: #{tpu_custom_call.1} parent=1 // pred_region
      %s582 = ssub.s32 128, 128
      %583 = vsyncadd [#allocation4], %s582
      %s585 = sshll.u32 [#allocation7], 4
      %s586 = int_to_ptr.vmem [resolvable:$true] %s585
      %588 = dma.vmem_to_hbm [thread:$0]  %s586, 128, %s2, [#allocation4]
    $region21: #{tpu_custom_call.1} parent=1 // pred_fallthru
      _
    // Predicated region
    $region22: #{tpu_custom_call.1} parent=1 // pred_check
      _
    $region23: #{tpu_custom_call.1} parent=1 // pred_check_branch
      %590 = sbr.rel (0) target = $region25
    $region24: #{tpu_custom_call.1} parent=1 // pred_region
      %591 = dma.done [#allocation4], 128
    $region25: #{tpu_custom_call.1} parent=1 // pred_fallthru
      _
    %592 = vsyncpa [#allocation3], 1
    %593 = vsyncpa [#allocation4], 1
    %594 = vsyncpa [#allocation5], 1

</llo_original>
